<compile_context>
chip_gen: v5e
topology: v5e:2x2
jax: 0.10.0
libtpu: 0.0.40
codegen_flags: <defaults>
</compile_context>

<pallas_src>
import jax
import jax.numpy as jnp
from jax import lax
from jax import ops as jax_ops
from jax.experimental import pallas as pl
from jax.experimental.pallas import tpu as pltpu

TILE_GRAN = 512                      # folded-lane padding granularity (multiple of 128)
SMALL_PARAM_MAX_NUMEL = 1 << 16      # per-client numel threshold for the "small" class
SMALL_TILE_CAP = 1024                # folded-lane tile cap for the small class
TARGET_BLOCK_BYTES = 2 << 20         # ~2 MiB blocks for the big class (byte-budgeted)
VMEM_LIMIT_BYTES = 32 * 1024 * 1024  # explicit scoped-VMEM cap (safe on v5e/v6e/v7x)


# -------------------------- Pallas kernels --------------------------------- #

def _stats_kernel(d_ref, sum_ref, gram_ref):
    """Per-tile row sums + Gram; Gram contracts the lane dim directly (no transpose)."""
    d = d_ref[...]                                            # (ROWS, TILE_N) f32
    sum_ref[...] = jnp.sum(d, axis=1, keepdims=True)          # (ROWS, 1)
    gram_ref[...] = lax.dot_general(
        d, d, dimension_numbers=(((1,), (1,)), ((), ())),
        preferred_element_type=jnp.float32)                   # (ROWS, ROWS)


def _apply_kernel(pid_ref, f_ref, w_ref, beta_ref, p_ref, d_ref, o_ref):
    """new_param = last_param + delta + beta * (softmax_attn @ (f * delta)).

    f/W/beta are full per-param tables resident in VMEM (constant index_map); the row
    for this tile is selected here with the scalar-prefetched param id.
    """
    pid = pid_ref[pl.program_id(0)]                           # SMEM scalar
    f = f_ref[pid]                                            # (ROWS, 1) gate (1+sigmoid)
    w = w_ref[pid]                                            # (ROWS, ROWS) block-diag attn
    beta = beta_ref[pid]                                      # (ROWS, 1)
    d = d_ref[...]                                            # (ROWS, TILE_N)
    out = jnp.dot(w, f * d, preferred_element_type=jnp.float32)
    o_ref[...] = p_ref[...] + d + beta * out                  # lane-dense full-tile store


# -------------------------- kernel wrappers --------------------------------- #

def delta_tile_stats(d_slab, tile_n):
    """Per-tile row sums + Gram over one (ROWS, W) delta slab; fully parallel grid."""
    rows, wtot = d_slab.shape
    t = wtot // tile_n
    return pl.pallas_call(
        _stats_kernel,
        out_shape=(jax.ShapeDtypeStruct((t, rows, 1), jnp.float32),
                   jax.ShapeDtypeStruct((t, rows, rows), jnp.float32)),
        grid_spec=pltpu.PrefetchScalarGridSpec(
            num_scalar_prefetch=0,
            grid=(t,),
            in_specs=[pl.BlockSpec((rows, tile_n), lambda i: (0, i))],
            out_specs=[pl.BlockSpec((None, rows, 1), lambda i: (i, 0, 0)),
                       pl.BlockSpec((None, rows, rows), lambda i: (i, 0, 0))]),
        compiler_params=pltpu.CompilerParams(
            dimension_semantics=("parallel",),
            vmem_limit_bytes=VMEM_LIMIT_BYTES),
    )(d_slab)


def apply_update(pid_tbl, f_fold, w_fold, beta_fold, p_slab, d_slab, tile_n):
    """Batched: out slab = P + D + beta * (W @ (f * D)), per-param via the pid table."""
    rows, wtot = d_slab.shape
    n_params = f_fold.shape[0]
    t = wtot // tile_n
    return pl.pallas_call(
        _apply_kernel,
        out_shape=jax.ShapeDtypeStruct((rows, wtot), jnp.float32),
        grid_spec=pltpu.PrefetchScalarGridSpec(
            num_scalar_prefetch=1,
            grid=(t,),
            in_specs=[
                # tiny per-param tables: whole array, constant index -> VMEM resident
                pl.BlockSpec((n_params, rows, 1), lambda i, pid: (0, 0, 0)),      # f
                pl.BlockSpec((n_params, rows, rows), lambda i, pid: (0, 0, 0)),   # W
                pl.BlockSpec((n_params, rows, 1), lambda i, pid: (0, 0, 0)),      # beta
                # streamed slabs (default double-buffering; bump pl.Buffered(3) on v7x
                # only if a bundle dump shows exposed DMA at param boundaries)
                pl.BlockSpec((rows, tile_n), lambda i, pid: (0, i)),              # last P
                pl.BlockSpec((rows, tile_n), lambda i, pid: (0, i)),              # delta D
            ],
            out_specs=pl.BlockSpec((rows, tile_n), lambda i, pid: (0, i))),
        # alias the last-params slab to the output: saves a (ROWS, W) HBM allocation
        input_output_aliases={4: 0},
        compiler_params=pltpu.CompilerParams(
            dimension_semantics=("parallel",),
            vmem_limit_bytes=VMEM_LIMIT_BYTES),
    )(pid_tbl, f_fold, w_fold, beta_fold, p_slab, d_slab)


# -------------------------- packing helpers --------------------------------- #

def _round_up(x, m):
    return (x + m - 1) // m * m


def _plan_classes(numels, fold, rows):
    """Partition params into (tile_width, [global param indices]) size classes."""
    big_cap = max(TILE_GRAN,
                  (TARGET_BLOCK_BYTES // (rows * 4)) // TILE_GRAN * TILE_GRAN)
    classes = []
    for is_big, cap in ((False, SMALL_TILE_CAP), (True, big_cap)):
        idxs = [i for i, n in enumerate(numels) if (n > SMALL_PARAM_MAX_NUMEL) == is_big]
        if not idxs:
            continue
        wf_max = max(-(-numels[i] // fold) for i in idxs)      # ceil div
        tile = min(cap, _round_up(wf_max, TILE_GRAN))
        classes.append((tile, idxs))
    return classes


def _fold_rows(x, kk, fold, rows, wf):
    """(K, fold*wf) -> (rows, wf): stack the `fold` width-chunks of every client."""
    return x.reshape(kk, fold, wf).transpose(1, 0, 2).reshape(rows, wf)


def _unfold_rows(x, kk, fold, rows, wf):
    """(rows, wf) -> (K, fold*wf): inverse of _fold_rows."""
    del rows
    return x.reshape(fold, kk, wf).transpose(1, 0, 2).reshape(kk, fold * wf)


def _build_class_slabs(names, numels, idxs, tile, fold, kk, rows, last_list, delta_list):
    d_cols, p_cols, pid_list, layout = [], [], [], {}
    off = 0
    for gi in idxs:
        name, n = names[gi], numels[gi]
        wf = _round_up(-(-n // fold), tile)                    # folded width, tile-multiple
        npad = fold * wf
        d = jnp.stack([delta_list[j][name].reshape(-1) for j in range(kk)]).astype(jnp.float32)
        p = jnp.stack([last_list[j][name].reshape(-1) for j in range(kk)]).astype(jnp.float32)
        d = jnp.pad(d, ((0, 0), (0, npad - n)))
        p = jnp.pad(p, ((0, 0), (0, npad - n)))
        d_cols.append(_fold_rows(d, kk, fold, rows, wf))
        p_cols.append(_fold_rows(p, kk, fold, rows, wf))
        pid_list += [gi] * (wf // tile)
        layout[gi] = (off, wf)
        off += wf
    return (jnp.concatenate(d_cols, axis=1), jnp.concatenate(p_cols, axis=1),
            jnp.asarray(pid_list, dtype=jnp.int32), layout)


# -------------------------- forward (module semantics) ---------------------- #

def _mlp_adjust_pool(params):
    # nn.Sequential(Linear(E, E//2), ReLU, Linear(E//2, delta_dim)) then mean(dim=1)
    t = params["task_embeddings"]
    h = jax.nn.relu(t @ params["mlp_w1"].T + params["mlp_b1"])
    adjusted = h @ params["mlp_w2"].T + params["mlp_b2"]       # (K, delta_dim)
    return jnp.mean(adjusted, axis=1, keepdims=True)           # (K, 1)


def hyper_forward(params, last_param_dict_list, delta_dict_list, common_keys):
    kk = params["K"]
    pool = _mlp_adjust_pool(params)                            # (K, 1) tiny glue

    # deep-copy semantics: non-common keys keep last params unchanged
    new_param = [dict(d) for d in last_param_dict_list]
    names = [n for n in last_param_dict_list[0] if n in common_keys]
    if not names:
        return new_param

    n_params = len(names)
    numels = [int(delta_dict_list[0][n].size) for n in names]
    shapes = [delta_dict_list[0][n].shape for n in names]

    # sublane fold: K clients -> rows = K*fold sublanes (full 8-row f32 vregs when K<8)
    fold = 8 // kk if (kk < 8 and 8 % kk == 0) else 1
    rows = kk * fold

    classes = _plan_classes(numels, fold, rows)
    built = [(tile, idxs) + _build_class_slabs(names, numels, idxs, tile, fold, kk, rows,
                                               last_param_dict_list, delta_dict_list)
             for tile, idxs in classes]

    # ---- Pallas pass 1: per-tile row sums + Gram; tiny segment-sum tiles -> params ----
    tile_sums, tile_grams, tile_pids = [], [], []
    for tile, idxs, d_slab, p_slab, pid_tbl, layout in built:
        tsum, tgram = delta_tile_stats(d_slab, tile)
        tile_sums.append(tsum)
        tile_grams.append(tgram)
        tile_pids.append(pid_tbl)
    pids = jnp.concatenate(tile_pids)
    sums_f = jax_ops.segment_sum(jnp.concatenate(tile_sums, axis=0), pids,
                                 num_segments=n_params)        # (P, rows, 1)
    gram_f = jax_ops.segment_sum(jnp.concatenate(tile_grams, axis=0), pids,
                                 num_segments=n_params)        # (P, rows, rows)
    # unfold the sublane packing: sum the fold copies / take the block-diag of the Gram
    sums = sums_f.reshape(n_params, fold, kk, 1).sum(axis=1)                   # (P, K, 1)
    gram_r = gram_f.reshape(n_params, fold, kk, fold, kk)
    gram = sum(gram_r[:, gdx, :, gdx, :] for gdx in range(fold))               # (P, K, K)

    # ---- tiny K-sized glue: site gating + softmax attention + beta clamp (plain JAX) ----
    n_arr = jnp.asarray(numels, jnp.float32)[:, None, None]                    # (P, 1, 1)
    mean = sums / n_arr                                                        # cross_delta_pooled
    pool_b = jnp.broadcast_to(pool[None], (n_params, kk, 1))
    gate_in = jnp.concatenate([mean, pool_b], axis=-1)                         # (P, K, 2)
    f_all = 1.0 + jax.nn.sigmoid(gate_in @ params["gate_w"].T + params["gate_b"])
    scale = n_arr ** -0.5
    s_mat = scale * (f_all @ jnp.swapaxes(f_all, -1, -2)) * gram               # == scale*E@E^T
    w_all = jax.nn.softmax(s_mat, axis=-1)                                     # (P, K, K)
    beta_all = jnp.stack([jnp.clip(params["beta"][n], 0.0, 1.0) for n in names])[..., None]

    # fold the per-client tables to the packed sublane layout
    if fold > 1:
        eye_f = jnp.eye(fold, dtype=jnp.float32)
        w_fold = (eye_f[None, :, None, :, None] * w_all[:, None, :, None, :]
                  ).reshape(n_params, rows, rows)                              # block-diagonal
        f_fold = jnp.tile(f_all, (1, fold, 1))
        beta_fold = jnp.tile(beta_all, (1, fold, 1))
    else:
        w_fold, f_fold, beta_fold = w_all, f_all, beta_all

    # ---- Pallas pass 2: attention-weighted delta + residual update ----
    for tile, idxs, d_slab, p_slab, pid_tbl, layout in built:
        out_slab = apply_update(pid_tbl,
                                f_fold.astype(jnp.float32),
                                w_fold.astype(jnp.float32),
                                beta_fold.astype(jnp.float32),
                                p_slab, d_slab, tile)
        for gi in idxs:
            off, wf = layout[gi]
            o = _unfold_rows(out_slab[:, off:off + wf], kk, fold, rows, wf)
            for i in range(kk):
                new_param[i][names[gi]] = o[i, :numels[gi]].reshape(shapes[gi])
    return new_param


# -------------------------- pure-JAX reference (mirrors PyTorch) ------------ #

def reference_forward(params, last_list, delta_list, common_keys):
    kk = params["K"]
    pool = _mlp_adjust_pool(params)
    gate = lambda x: jax.nn.sigmoid(x @ params["gate_w"].T + params["gate_b"])
    new_list = [dict(d) for d in last_list]
    for i in range(kk):
        for name, param in last_list[i].items():
            if name not in common_keys:
                new_list[i][name] = param
                continue
            layer_beta = jnp.clip(params["beta"][name], 0.0, 1.0)
            cross = jnp.stack([delta_list[j][name].reshape(-1) for j in range(kk)])
            selfd = delta_list[i][name].reshape(1, -1)
            cross_p = jnp.mean(cross, axis=1, keepdims=True)
            self_p = jnp.mean(selfd, axis=1, keepdims=True)
            cross_ind = jnp.concatenate([cross_p, pool], axis=1)
            self_ind = jnp.concatenate([self_p, pool[i][None, :]], axis=1)
            cross_e = gate(cross_ind) * cross + cross
            self_e = gate(self_ind) * selfd + selfd
            scale = self_e.shape[-1] ** (-0.5)
            attn = jax.nn.softmax(self_e @ cross_e.T * scale, axis=-1)
            out = attn @ cross_e
            new_delta = delta_list[i][name] + layer_beta[i] * out.reshape(delta_list[i][name].shape)
            new_list[i][name] = last_list[i][name] + new_delta
    return new_list


# -------------------------- demo ------------------------------------------- #

if __name__ == "__main__":
    key = jax.random.PRNGKey(0)
    K = 4                  # number of decoders / clients
    E = 32                 # task embedding dim (CLIP would be 512; small here)
    delta_dim = 1
    init_beta = 0.1

    common_keys = {
        "sam_mask_decoder.conv.weight",                         # numel 144   (small class)
        "memory_encoder.proj.weight",                           # numel 1024  (small class)
        "obj_ptr_proj.bias",                                    # numel 16    (small class)
        "memory_attention.layers.0.self_attn.q_proj.weight",    # numel 131072 (big class)
    }
    shapes = {
        "sam_mask_decoder.conv.weight": (4, 4, 3, 3),
        "memory_encoder.proj.weight": (16, 64),
        "obj_ptr_proj.bias": (16,),
        "memory_attention.layers.0.self_attn.q_proj.weight": (512, 256),
        "image_encoder.block0.weight": (8, 8),                  # NOT common: passthrough
    }

    keys = jax.random.split(key, 16)
    params = {
        "K": K,
        "task_embeddings": jax.random.normal(keys[0], (K, E), jnp.float32),
        "mlp_w1": jax.random.normal(keys[1], (E // 2, E), jnp.float32) * 0.1,
        "mlp_b1": jax.random.normal(keys[2], (E // 2,), jnp.float32) * 0.1,
        "mlp_w2": jax.random.normal(keys[3], (delta_dim, E // 2), jnp.float32) * 0.1,
        "mlp_b2": jax.random.normal(keys[4], (delta_dim,), jnp.float32) * 0.1,
        "gate_w": jax.random.normal(keys[5], (delta_dim, 2 * delta_dim), jnp.float32) * 0.5,
        "gate_b": jax.random.normal(keys[6], (delta_dim,), jnp.float32) * 0.1,
        "beta": {name: jnp.ones((K,), jnp.float32) * init_beta for name in common_keys},
    }

    # deterministic per-client last params and deltas
    last_param_dict_list, delta_dict_list = [], []
    for i in range(K):
        last_d, delta_d = {}, {}
        for idx, (name, shp) in enumerate(shapes.items()):
            kp, kd = jax.random.split(jax.random.fold_in(keys[7], idx * 131 + i), 2)
            last_d[name] = jax.random.normal(kp, shp, jnp.float32)
            delta_d[name] = jax.random.normal(kd, shp, jnp.float32) * 0.05
        last_param_dict_list.append(last_d)
        delta_dict_list.append(delta_d)

    # run Pallas-kernel forward
    new_params = hyper_forward(params, last_param_dict_list, delta_dict_list, common_keys)
    for d in new_params:
        for v in d.values():
            jax.block_until_ready(v)

    # check against the faithful pure-JAX reference of the PyTorch forward
    ref_params = reference_forward(params, last_param_dict_list, delta_dict_list, common_keys)
    for i in range(K):
        for name in shapes:
            got, want = new_params[i][name], ref_params[i][name]
            assert got.shape == want.shape, (name, got.shape, want.shape)
            if not jnp.allclose(got, want, rtol=1e-3, atol=1e-4):
                raise AssertionError(f"mismatch for client {i}, param {name}")

    print("KERNEL_OK")
</pallas_src>

<mosaic_0001>
module attributes {stable_mosaic.version = 11 : i64} {
  func.func @_stats_kernel(%arg0: i32, %arg1: memref<8x512xf32, #tpu.memory_space<vmem>>, %arg2: memref<1x8x1xf32, #tpu.memory_space<vmem>>, %arg3: memref<1x8x8xf32, #tpu.memory_space<vmem>>) attributes {dimension_semantics = [#tpu.dimension_semantics<parallel>], iteration_bounds = array<i64: 3>, scalar_prefetch = 0 : i64, scratch_operands = 0 : i64, tpu.core_type = #tpu.core_type<tc>, window_params = [{transform_indices = @transform_0, window_bounds = array<i64: 8, 512>}, {transform_indices = @transform_1, window_bounds = array<i64: 1, 8, 1>}, {transform_indices = @transform_2, window_bounds = array<i64: 1, 8, 8>}]} {
    %c0 = arith.constant 0 : index
    %c0_0 = arith.constant 0 : index
    %0 = vector.load %arg1[%c0, %c0_0] : memref<8x512xf32, #tpu.memory_space<vmem>>, vector<8x512xf32>
    %cst = arith.constant dense<0.000000e+00> : vector<8xf32>
    %1 = vector.multi_reduction <add>, %0, %cst [1] : vector<8x512xf32> to vector<8xf32>
    %2 = vector.shape_cast %1 : vector<8xf32> to vector<8x1xf32>
    %c0_1 = arith.constant 0 : index
    %c0_2 = arith.constant 0 : index
    %c0_3 = arith.constant 0 : index
    %3 = vector.load %arg2[%c0_1, %c0_2, %c0_3] : memref<1x8x1xf32, #tpu.memory_space<vmem>>, vector<1x8x1xf32>
    %4 = vector.shape_cast %3 : vector<1x8x1xf32> to vector<8x1xf32>
    %5 = vector.shape_cast %2 : vector<8x1xf32> to vector<1x8x1xf32>
    tpu.vector_store %arg2[%c0_1, %c0_2, %c0_3], %5 {strides = array<i32>} : memref<1x8x1xf32, #tpu.memory_space<vmem>>, vector<1x8x1xf32>,
    %cst_4 = arith.constant dense<0.000000e+00> : vector<8x8xf32>
    %6 = tpu.matmul %0, %0, %cst_4 {dimension_numbers = #tpu.dot_dimension_numbers<[1], [1], [0], [0], [0, 0, 1, 0], [], []>} : vector<8x512xf32>, vector<8x512xf32>, vector<8x8xf32> -> vector<8x8xf32>
    %c0_5 = arith.constant 0 : index
    %c0_6 = arith.constant 0 : index
    %c0_7 = arith.constant 0 : index
    %7 = vector.load %arg3[%c0_5, %c0_6, %c0_7] : memref<1x8x8xf32, #tpu.memory_space<vmem>>, vector<1x8x8xf32>
    %8 = vector.shape_cast %7 : vector<1x8x8xf32> to vector<8x8xf32>
    %9 = vector.shape_cast %6 : vector<8x8xf32> to vector<1x8x8xf32>
    tpu.vector_store %arg3[%c0_5, %c0_6, %c0_7], %9 {strides = array<i32>} : memref<1x8x8xf32, #tpu.memory_space<vmem>>, vector<1x8x8xf32>,
    return
  }
  func.func @transform_0(%arg0: i32) -> (i32, i32) {
    %c0_i32 = arith.constant 0 : i32
    %c0_i32_0 = arith.constant 0 : i32
    return %c0_i32, %arg0 : i32, i32
  }
  func.func @transform_1(%arg0: i32) -> (i32, i32, i32) {
    %c0_i32 = arith.constant 0 : i32
    %c0_i32_0 = arith.constant 0 : i32
    %c0_i32_1 = arith.constant 0 : i32
    return %arg0, %c0_i32, %c0_i32_0 : i32, i32, i32
  }
  func.func @transform_2(%arg0: i32) -> (i32, i32, i32) {
    %c0_i32 = arith.constant 0 : i32
    %c0_i32_0 = arith.constant 0 : i32
    %c0_i32_1 = arith.constant 0 : i32
    return %arg0, %c0_i32, %c0_i32_0 : i32, i32, i32
  }
}

</mosaic_0001>

<llo_original>
// kernel: tpu_custom_call.1
$region0: #{tpu_custom_call.1}
  #allocation0 [shape = 'u32[]', space=smem, size = 0x4, offset = 0x4, fixed_abs, tag = 'smem constant byte address 0x4 - core index']
  #allocation1 [shape = 'u32[72,128]{1,0:T(1,128)}', space=vmem, size = 0x9000, scoped, tag = 'internal scratch']
  %s0 = inlined_call_operand.hbm [shape: f32[8,1536], index: 0, kind: input, shape index: {}]
  %s1 = inlined_call_operand.vmem [shape: f32[3,8,1], index: 1, kind: output, shape index: {0}]
  %s2 = inlined_call_operand.hbm [shape: f32[3,8,8], index: 2, kind: output, shape index: {1}]
  %3 = xla_tuple %s1, %s2
  %s4 = sld [smem:[#allocation0]]
  $region49: #{tpu_custom_call.1} parent=0
    _
  %s6 = ssub.s32 1, %s4
  %s7 = scalar_select 0, %s6, %s4
  $region1: #{tpu_custom_call.1} parent=0
    #allocation2 [shape = 'u8[32768]{0}', space=vmem, size = 0x8000, scoped, tag = 'input window, operand 0']
    #allocation3 [shape = 's32[2]{0}', space=sflag, size = 0x8, scoped, tag = 'scoped memory for tpu_custom_call.1']
    #allocation4 [shape = 's32[2]{0}', space=sflag, size = 0x8, scoped, tag = 'scoped memory for tpu_custom_call.1']
    #allocation5 [shape = 'u8[8192]{0}', space=vmem, size = 0x2000, scoped, tag = 'output window, operand 1']
    %8 = vsyncpa [#allocation3], 0
    %s9 = scalar_lea.sflag [#allocation3], 1
    %10 = vsyncpa %s9, 0
    %11 = vsyncpa [#allocation4], 0
    %s12 = scalar_lea.sflag [#allocation4], 1
    %13 = vsyncpa %s12, 0
    loop: start=0, step=1, limit=5
    $region2: #{tpu_custom_call.1} parent=1 // loop_pre_header
      _
    $region3: #{tpu_custom_call.1} parent=1 // loop_header
      %s15 = sphi 0, %s19
      %p16 = scmp.ge.s32.totalorder %s15, 5
      %s25 = sphi 0, %s27
      %s28 = sphi 0, %s25
      %s29 = sphi 0, %s28
      %s45 = sphi 0, %s29
      %s51 = sphi 0, %s53
      %s54 = sphi 0, %s51
      %s55 = sphi 0, %s54
      %s71 = sphi 0, %s55
      %s77 = sphi 0, %s79
      %s80 = sphi 0, %s77
      %s81 = sphi 0, %s80
      %s97 = sphi 0, %s81
    $region4: #{tpu_custom_call.1} parent=1 // loop_header_branch
      %18 = sbr.rel (%p16) target = $region8
    $region5: #{tpu_custom_call.1} parent=1 // loop_body
      %s20 = ssub.s32 %s15, 1
      %s21 = ssub.s32 %s15, 2
      %s22 = sadd.s32 %s15, 1
      %s23 = ssub.s32 %s15, %s22
      %p24 = scmp.eq.s32.totalorder %s23, 0
      %s26 = sadd.s32 %s25, 1
      %s27 = scalar_select %p24, %s25, %s26
      %p30 = pneg %p24
      %p31 = scmp.eq.s32.totalorder %s15, 2
      %p32 = por %p30, %p31
      %p33 = scmp.ne.s32.totalorder %s25, %s28
      %p34 = scmp.eq.s32.totalorder %s15, 0
      %p35 = por %p33, %p34
      %p36 = scmp.ne.s32.totalorder %s25, %s28
      %p37 = scmp.eq.s32.totalorder %s20, 2
      %p38 = por %p36, %p37
      %p39 = scmp.ne.s32.totalorder %s28, %s29
      %p40 = scmp.eq.s32.totalorder %s20, 0
      %p41 = por %p39, %p40
      %p42 = scmp.ne.s32.totalorder %s28, %s29
      %p43 = scmp.eq.s32.totalorder %s21, 2
      %p44 = por %p42, %p43
      %p46 = scmp.ne.s32.totalorder %s29, %s45
      %p47 = scmp.eq.s32.totalorder %s21, 0
      %p48 = por %p46, %p47
      %s49 = ssub.s32 %s15, %s22
      %p50 = scmp.eq.s32.totalorder %s49, 0
      %s52 = sadd.s32 %s51, 1
      %s53 = scalar_select %p50, %s51, %s52
      %p56 = pneg %p50
      %p57 = scmp.eq.s32.totalorder %s15, 2
      %p58 = por %p56, %p57
      %p59 = scmp.ne.s32.totalorder %s51, %s54
      %p60 = scmp.eq.s32.totalorder %s15, 0
      %p61 = por %p59, %p60
      %p62 = scmp.ne.s32.totalorder %s51, %s54
      %p63 = scmp.eq.s32.totalorder %s20, 2
      %p64 = por %p62, %p63
      %p65 = scmp.ne.s32.totalorder %s54, %s55
      %p66 = scmp.eq.s32.totalorder %s20, 0
      %p67 = por %p65, %p66
      %p68 = scmp.ne.s32.totalorder %s54, %s55
      %p69 = scmp.eq.s32.totalorder %s21, 2
      %p70 = por %p68, %p69
      %p72 = scmp.ne.s32.totalorder %s55, %s71
      %p73 = scmp.eq.s32.totalorder %s21, 0
      %p74 = por %p72, %p73
      %s75 = ssub.s32 %s15, %s22
      %p76 = scmp.eq.s32.totalorder %s75, 0
      %s78 = sadd.s32 %s77, 1
      %s79 = scalar_select %p76, %s77, %s78
      %p82 = pneg %p76
      %p83 = scmp.eq.s32.totalorder %s15, 2
      %p84 = por %p82, %p83
      %p85 = scmp.ne.s32.totalorder %s77, %s80
      %p86 = scmp.eq.s32.totalorder %s15, 0
      %p87 = por %p85, %p86
      %p88 = scmp.ne.s32.totalorder %s77, %s80
      %p89 = scmp.eq.s32.totalorder %s20, 2
      %p90 = por %p88, %p89
      %p91 = scmp.ne.s32.totalorder %s80, %s81
      %p92 = scmp.eq.s32.totalorder %s20, 0
      %p93 = por %p91, %p92
      %p94 = scmp.ne.s32.totalorder %s80, %s81
      %p95 = scmp.eq.s32.totalorder %s21, 2
      %p96 = por %p94, %p95
      %p98 = scmp.ne.s32.totalorder %s81, %s97
      %p99 = scmp.eq.s32.totalorder %s21, 0
      %p100 = por %p98, %p99
      %p101 = scmp.le.s32.totalorder 1, %s15
      %p102 = scmp.lt.s32.totalorder %s15, 4
      %p103 = pnand %p101, %p102
      %p104 = pneg %p103
      // Predicated region
      $region9: #{tpu_custom_call.1} parent=5 // pred_check
        _
      $region10: #{tpu_custom_call.1} parent=5 // pred_check_branch
        %106 = sbr.rel (%p103) target = $region12
      $region11: #{tpu_custom_call.1} parent=5 // pred_region
        %s107 = ssub.s32 %s15, 1
      $region12: #{tpu_custom_call.1} parent=5 // pred_fallthru
        _
      %p108 = scmp.lt.s32.totalorder %s15, 3
      // Predicated region
      $region13: #{tpu_custom_call.1} parent=5 // pred_check
        %p109 = pneg %p108
      $region14: #{tpu_custom_call.1} parent=5 // pred_check_branch
        %111 = sbr.rel (%p109) target = $region16
      $region15: #{tpu_custom_call.1} parent=5 // pred_region
        // Predicated region
        $region17: #{tpu_custom_call.1} parent=15 // pred_check
          %p112 = pneg %p35
        $region18: #{tpu_custom_call.1} parent=15 // pred_check_branch
          %114 = sbr.rel (%p112) target = $region20
        $region19: #{tpu_custom_call.1} parent=15 // pred_region
          %s115 = sand.u32 %s25, 1
          %s116 = scalar_lea.sflag [#allocation3], %s115
          %s117 = sand.u32 %s25, 1
          %s118 = smul.addr %s117, 32
          %s119 = scalar_lea.vmem [#allocation2], %s118
          %s120 = smul.u32 4, %s15
          %122 = vsyncadd %s116, 0
          %s123 = smul.addr %s120, 8
          %s124 = scalar_lea.hbm %s0, %s123
          %s126 = sshll.u32 %s124, 4
          %s127 = int_to_ptr.hbm [resolvable:$true] %s126
          %s128 = sshll.u32 %s119, 4
          %s129 = int_to_ptr.vmem [resolvable:$true] %s128
          %131 = dma.hbm_to_vmem [thread:$0]  %s127, 512, %s129, %s116
        $region20: #{tpu_custom_call.1} parent=15 // pred_fallthru
          _
      $region16: #{tpu_custom_call.1} parent=5 // pred_fallthru
        _
      %p132 = scmp.le.s32.totalorder 1, %s15
      %p133 = scmp.lt.s32.totalorder %s15, 4
      %p134 = pnand %p132, %p133
      %p135 = pneg %p134
      // Predicated region
      $region21: #{tpu_custom_call.1} parent=5 // pred_check
        _
      $region22: #{tpu_custom_call.1} parent=5 // pred_check_branch
        %137 = sbr.rel (%p134) target = $region24
      $region23: #{tpu_custom_call.1} parent=5 // pred_region
        %s138 = ssub.s32 %s15, 1
        %s139 = sand.u32 %s28, 1
        %s140 = scalar_lea.sflag [#allocation3], %s139
        %s141 = sand.u32 %s28, 1
        %s142 = smul.addr %s141, 32
        %s143 = scalar_lea.vmem [#allocation2], %s142
        // Predicated region
        $region25: #{tpu_custom_call.1} parent=23 // pred_check
          %p144 = pneg %p41
        $region26: #{tpu_custom_call.1} parent=23 // pred_check_branch
          %146 = sbr.rel (%p144) target = $region28
        $region27: #{tpu_custom_call.1} parent=23 // pred_region
          %148 = dma.done %s140, 512
        $region28: #{tpu_custom_call.1} parent=23 // pred_fallthru
          _
        %s149 = sand.u32 %s28, 1
        %s150 = scalar_lea.sflag [#allocation3], %s149
        %s151 = sand.u32 %s28, 1
        %s152 = smul.addr %s151, 32
        %s153 = scalar_lea.vmem [#allocation2], %s152
        %p154 = pneg %p41
        %p155 = pneg %p38
        %p156 = pneg %p67
        %p157 = pneg %p64
        %p158 = scmp.lt.s32.totalorder %s20, 2
        %s159 = scalar_select %p158, %s20, 2
        %s160 = smul.addr %s159, 8
        %s161 = scalar_lea.vmem %s1, %s160
        %p162 = pneg %p93
        %p163 = pneg %p90
        %s164 = sand.u32 %s80, 1
        %s165 = scalar_lea.sflag [#allocation4], %s164
        %s166 = sand.u32 %s80, 1
        %s167 = smul.addr %s166, 8
        %s168 = scalar_lea.vmem [#allocation5], %s167
        %s169 = smul.u32 4, %s20
        %p170 = scmp.lt.s32.totalorder %s20, 2
        %s171 = scalar_select %p170, %s20, 2
        %s172 = smul.addr %s171, 8
        %s173 = scalar_lea.vmem %s1, %s172
        %v174 = vld [vmem:[%s143] sm:$0xff]
        %v175 = vld [vmem:[%s143 + $0x8] sm:$0xff]
        %v176 = vld [vmem:[%s143 + $0x10] sm:$0xff]
        %v177 = vld [vmem:[%s143 + $0x18] sm:$0xff]
        %v178 = vadd.f32 %v174, %v175
        %v179 = vadd.f32 %v178, %v176
        %v180 = vadd.f32 %v179, %v177
        %181 = vadd.xlane.f32.xlu0 %v180
        %v182 = vpop.xlane.xlu0 %181
        %vm183 = vcmask 7168
        %184 = vst.msk [vmem:[%s173] sm:$0xff] %vm183, %v182
        %185 = vmatpush.xpose.msra.mxu0 0.0
        %186 = vmatpush.xpose.msra.mxu0 0.0
        %187 = vmatpush.xpose.msra.mxu0 0.0
        %188 = vmatpush.xpose.msra.mxu0 0.0
        %189 = vmatpush.xpose.msra.mxu0 0.0
        %190 = vmatpush.xpose.msra.mxu0 0.0
        %191 = vmatpush.xpose.msra.mxu0 0.0
        %192 = vmatpush.xpose.msra.mxu0 0.0
        %193 = vmatpush.xpose.msra.mxu0 0.0
        %194 = vmatpush.xpose.msra.mxu0 0.0
        %195 = vmatpush.xpose.msra.mxu0 0.0
        %196 = vmatpush.xpose.msra.mxu0 0.0
        %197 = vmatpush.xpose.msra.mxu0 0.0
        %198 = vmatpush.xpose.msra.mxu0 0.0
        %199 = vmatpush.xpose.msra.mxu0 0.0
        %200 = vmatpush.xpose.msra.mxu0 %v174
        %201 = vmatmul.f32.gmra.mxu0 %v174
        %v202 = vpop.f32.mrf.mxu0
        %v203 = vadd.f32 0.0, %v202
        %204 = vdwg.mxu0
        %205 = vmatpush.xpose.msra.mxu0 0.0
        %206 = vmatpush.xpose.msra.mxu0 0.0
        %207 = vmatpush.xpose.msra.mxu0 0.0
        %208 = vmatpush.xpose.msra.mxu0 0.0
        %209 = vmatpush.xpose.msra.mxu0 0.0
        %210 = vmatpush.xpose.msra.mxu0 0.0
        %211 = vmatpush.xpose.msra.mxu0 0.0
        %212 = vmatpush.xpose.msra.mxu0 0.0
        %213 = vmatpush.xpose.msra.mxu0 0.0
        %214 = vmatpush.xpose.msra.mxu0 0.0
        %215 = vmatpush.xpose.msra.mxu0 0.0
        %216 = vmatpush.xpose.msra.mxu0 0.0
        %217 = vmatpush.xpose.msra.mxu0 0.0
        %218 = vmatpush.xpose.msra.mxu0 0.0
        %219 = vmatpush.xpose.msra.mxu0 0.0
        %220 = vmatpush.xpose.msra.mxu0 %v175
        %221 = vmatmul.f32.gmra.mxu0 %v175
        %v222 = vpop.f32.mrf.mxu0
        %v223 = vadd.f32 %v203, %v222
        %224 = vdwg.mxu0
        %225 = vmatpush.xpose.msra.mxu0 0.0
        %226 = vmatpush.xpose.msra.mxu0 0.0
        %227 = vmatpush.xpose.msra.mxu0 0.0
        %228 = vmatpush.xpose.msra.mxu0 0.0
        %229 = vmatpush.xpose.msra.mxu0 0.0
        %230 = vmatpush.xpose.msra.mxu0 0.0
        %231 = vmatpush.xpose.msra.mxu0 0.0
        %232 = vmatpush.xpose.msra.mxu0 0.0
        %233 = vmatpush.xpose.msra.mxu0 0.0
        %234 = vmatpush.xpose.msra.mxu0 0.0
        %235 = vmatpush.xpose.msra.mxu0 0.0
        %236 = vmatpush.xpose.msra.mxu0 0.0
        %237 = vmatpush.xpose.msra.mxu0 0.0
        %238 = vmatpush.xpose.msra.mxu0 0.0
        %239 = vmatpush.xpose.msra.mxu0 0.0
        %240 = vmatpush.xpose.msra.mxu0 %v176
        %241 = vmatmul.f32.gmra.mxu0 %v176
        %v242 = vpop.f32.mrf.mxu0
        %v243 = vadd.f32 %v223, %v242
        %244 = vdwg.mxu0
        %245 = vmatpush.xpose.msra.mxu0 0.0
        %246 = vmatpush.xpose.msra.mxu0 0.0
        %247 = vmatpush.xpose.msra.mxu0 0.0
        %248 = vmatpush.xpose.msra.mxu0 0.0
        %249 = vmatpush.xpose.msra.mxu0 0.0
        %250 = vmatpush.xpose.msra.mxu0 0.0
        %251 = vmatpush.xpose.msra.mxu0 0.0
        %252 = vmatpush.xpose.msra.mxu0 0.0
        %253 = vmatpush.xpose.msra.mxu0 0.0
        %254 = vmatpush.xpose.msra.mxu0 0.0
        %255 = vmatpush.xpose.msra.mxu0 0.0
        %256 = vmatpush.xpose.msra.mxu0 0.0
        %257 = vmatpush.xpose.msra.mxu0 0.0
        %258 = vmatpush.xpose.msra.mxu0 0.0
        %259 = vmatpush.xpose.msra.mxu0 0.0
        %260 = vmatpush.xpose.msra.mxu0 %v177
        %261 = vmatmul.f32.gmra.mxu0 %v177
        %v262 = vpop.f32.mrf.mxu0
        %v263 = vadd.f32 %v243, %v262
        %264 = vdwg.mxu0
        %vm265 = vcmask 64512
        %266 = vst.msk [vmem:[%s168] sm:$0xff] %vm265, %v263
        %p267 = scmp.lt.s32.totalorder %s20, 2
        %s268 = scalar_select %p267, %s20, 2
        %s269 = smul.addr %s268, 8
        %s270 = scalar_lea.vmem %s1, %s269
        %s271 = sand.u32 %s80, 1
        %s272 = scalar_lea.sflag [#allocation4], %s271
        %s273 = sand.u32 %s80, 1
        %s274 = smul.addr %s273, 8
        %s275 = scalar_lea.vmem [#allocation5], %s274
        // Predicated region
        $region29: #{tpu_custom_call.1} parent=23 // pred_check
          %p276 = pneg %p64
        $region30: #{tpu_custom_call.1} parent=23 // pred_check_branch
          %278 = sbr.rel (%p276) target = $region32
        $region31: #{tpu_custom_call.1} parent=23 // pred_region
          _
        $region32: #{tpu_custom_call.1} parent=23 // pred_fallthru
          _
        // Predicated region
        $region33: #{tpu_custom_call.1} parent=23 // pred_check
          %p279 = pneg %p90
        $region34: #{tpu_custom_call.1} parent=23 // pred_check_branch
          %281 = sbr.rel (%p279) target = $region36
        $region35: #{tpu_custom_call.1} parent=23 // pred_region
          %283 = vsyncadd %s272, 0
          %s284 = smul.addr %s20, 8
          %s285 = scalar_lea.hbm %s2, %s284
          %s287 = sshll.u32 %s275, 4
          %s288 = int_to_ptr.vmem [resolvable:$true] %s287
          %s289 = sshll.u32 %s285, 4
          %s290 = int_to_ptr.hbm [resolvable:$true] %s289
          %292 = dma.vmem_to_hbm [thread:$0]  %s288, 128, %s290, %s272
        $region36: #{tpu_custom_call.1} parent=23 // pred_fallthru
          _
      $region24: #{tpu_custom_call.1} parent=5 // pred_fallthru
        _
      %p293 = scmp.le.s32.totalorder 2, %s15
      // Predicated region
      $region37: #{tpu_custom_call.1} parent=5 // pred_check
        %p294 = pneg %p293
      $region38: #{tpu_custom_call.1} parent=5 // pred_check_branch
        %296 = sbr.rel (%p294) target = $region40
      $region39: #{tpu_custom_call.1} parent=5 // pred_region
        %s297 = ssub.s32 %s15, 2
        // Predicated region
        $region41: #{tpu_custom_call.1} parent=39 // pred_check
          %p298 = pneg %p70
        $region42: #{tpu_custom_call.1} parent=39 // pred_check_branch
          %300 = sbr.rel (%p298) target = $region44
        $region43: #{tpu_custom_call.1} parent=39 // pred_region
          %p301 = scmp.lt.s32.totalorder %s21, 2
          %s302 = scalar_select %p301, %s21, 2
          %s303 = smul.addr %s302, 8
          %s304 = scalar_lea.vmem %s1, %s303
        $region44: #{tpu_custom_call.1} parent=39 // pred_fallthru
          _
        // Predicated region
        $region45: #{tpu_custom_call.1} parent=39 // pred_check
          %p305 = pneg %p96
        $region46: #{tpu_custom_call.1} parent=39 // pred_check_branch
          %307 = sbr.rel (%p305) target = $region48
        $region47: #{tpu_custom_call.1} parent=39 // pred_region
          %s308 = sand.u32 %s81, 1
          %s309 = scalar_lea.sflag [#allocation4], %s308
          %s310 = sand.u32 %s81, 1
          %s311 = smul.addr %s310, 8
          %s312 = scalar_lea.vmem [#allocation5], %s311
          %314 = dma.done %s309, 128
        $region48: #{tpu_custom_call.1} parent=39 // pred_fallthru
          _
      $region40: #{tpu_custom_call.1} parent=5 // pred_fallthru
        _
    $region6: #{tpu_custom_call.1} parent=1 // loop_footer
      %s19 = sadd.s32 1, %s15
    $region7: #{tpu_custom_call.1} parent=1 // loop_footer_branch
      %14 = sbr.rel target = $region3
    $region8: #{tpu_custom_call.1} parent=1 // loop_exit
      _
    %315 = vsyncpa [#allocation3], 1
    %s316 = scalar_lea.sflag [#allocation3], 1
    %317 = vsyncpa %s316, 1
    %318 = vsyncpa [#allocation4], 1
    %s319 = scalar_lea.sflag [#allocation4], 1
    %320 = vsyncpa %s319, 1

</llo_original>
